<compile_context>
chip_gen: v7x
topology: tpu7x:2x2x1
jax: 0.10.0
libtpu: 0.0.40
codegen_flags: <defaults>
</compile_context>

<pallas_src>
import functools

import jax
import jax.numpy as jnp
from jax.experimental import pallas as pl
from jax.experimental.pallas import tpu as pltpu


HIDDEN = 32      # fixed by the module definition (policy_1 / policy_2 widths)
LANE = 128       # TPU lane width (weight-slab minor dim)
B_SLAB_ROWS = 8  # rows 0/1/2 = b1/b2/b3, rest zero (sublane-aligned)


def _round_up(v, m):
    return ((v + m - 1) // m) * m


def _actor_kernel(x_ref, w_ref, b_ref, out_ref, *, feat, act, amplitude, mean):
    """One batch tile: (tile_n, F) features -> (tile_n, A) bounded actions."""
    x = x_ref[...]                                       # (tile_n, F)

    # Static slices into the compact weight / bias slabs (zero runtime cost).
    w1 = w_ref[0:feat, :]                                # (F , 128) cols>=32 are 0
    w2 = w_ref[feat:feat + HIDDEN, :]                    # (32, 128)
    w3 = w_ref[feat + HIDDEN:feat + 2 * HIDDEN, :]       # (32, 128) cols>=A are 0
    b1 = b_ref[0:1, :]                                   # (1, 128) broadcast rows
    b2 = b_ref[1:2, :]
    b3 = b_ref[2:3, :]
    dot_dtype = w1.dtype

    # policy_1 + ReLU (f32 accumulate / bias / ReLU; padded lanes stay 0)
    h = jnp.dot(x, w1, preferred_element_type=jnp.float32) + b1
    h = jnp.maximum(h, 0.0)

    # policy_2 + ReLU (contract only the 32 real hidden lanes)
    h = jnp.dot(h[:, :HIDDEN].astype(dot_dtype), w2,
                preferred_element_type=jnp.float32) + b2
    h = jnp.maximum(h, 0.0)

    # pi head + bounded continuous action; write only the A useful lanes
    pi = jnp.dot(h[:, :HIDDEN].astype(dot_dtype), w3,
                 preferred_element_type=jnp.float32) + b3
    out_ref[...] = (amplitude * jnp.tanh(pi[:, :act]) + mean).astype(out_ref.dtype)


def _pack_params(params, dot_dtype):
    """Coalesce (w1,b1,w2,b2,w3,b3) into one compact weight slab and one bias
    slab.  Weights stored (in, out); slab rows [0:F)=W1, [F:F+32)=W2,
    [F+32:F+64)=W3, padded to a multiple of 8 rows."""
    w1, b1, w2, b2, w3, b3 = params
    f = w1.shape[0]
    a = w3.shape[1]
    assert HIDDEN <= LANE and a <= LANE, "hidden/action widths must be <= 128"

    rows = _round_up(f + 2 * HIDDEN, 8)
    w_slab = jnp.zeros((rows, LANE), dot_dtype)
    w_slab = w_slab.at[0:f, :HIDDEN].set(w1.astype(dot_dtype))
    w_slab = w_slab.at[f:f + HIDDEN, :HIDDEN].set(w2.astype(dot_dtype))
    w_slab = w_slab.at[f + HIDDEN:f + 2 * HIDDEN, :a].set(w3.astype(dot_dtype))

    b_slab = jnp.zeros((B_SLAB_ROWS, LANE), jnp.float32)
    b_slab = b_slab.at[0, :HIDDEN].set(b1.reshape(-1).astype(jnp.float32))
    b_slab = b_slab.at[1, :HIDDEN].set(b2.reshape(-1).astype(jnp.float32))
    b_slab = b_slab.at[2, :a].set(b3.reshape(-1).astype(jnp.float32))
    return w_slab, b_slab


def nongraph_actor_forward(x, params, action_min, action_max, *,
                           tile_n=None, dot_dtype=jnp.float32):
    """x: (N, F) float32 node features (X_in). Returns (N, A) bounded actions.

    dot_dtype=jnp.bfloat16 halves x/weight HBM traffic and feeds the native
    bf16 MXU on v6e/v7x; accumulation, bias, ReLU and tanh stay f32.
    """
    w1, _, _, _, w3, _ = params
    n, f = x.shape
    a = w3.shape[1]
    assert f == w1.shape[0], "feature dim mismatch"

    # amplitude / mean are baked as compile-time scalars (they are fixed module
    # attributes in the PyTorch spec).
    try:
        amplitude = float(0.5 * (action_max - action_min))
        mean = float(0.5 * (action_max + action_min))
    except TypeError as e:
        # TODO(synk): pass traced / per-dimension bounds as a (1, LANE) input.
        raise TypeError("action_min/action_max must be static Python scalars") from e

    # Batch tiling: >=2 grid steps once the batch is big enough to matter (lets
    # v7x's two TensorCores both work via dimension_semantics=("parallel",));
    # tiny batches stay single-step; huge batches cap at 4096 rows per tile so
    # the x/out DMAs pipeline while the weight/bias slabs stay VMEM-resident.
    if tile_n is None:
        if n <= 64:
            tile_n = _round_up(n, 8)
        else:
            tile_n = min(_round_up(pl.cdiv(n, 2), 8), 4096)
    tile_n = max(8, _round_up(tile_n, 8))
    n_pad = _round_up(n, tile_n)
    grid = (n_pad // tile_n,)

    # Only row padding (to a tile multiple) -- no lane padding of x.
    x_in = x.astype(dot_dtype)
    if n_pad != n:
        x_in = jnp.zeros((n_pad, f), dot_dtype).at[:n, :].set(x_in)
    w_slab, b_slab = _pack_params(params, dot_dtype)
    w_rows = w_slab.shape[0]

    kernel = functools.partial(_actor_kernel, feat=f, act=a,
                               amplitude=amplitude, mean=mean)

    out = pl.pallas_call(
        kernel,
        out_shape=jax.ShapeDtypeStruct((n_pad, a), jnp.float32),
        grid_spec=pl.GridSpec(
            grid=grid,
            in_specs=[
                pl.BlockSpec((tile_n, f), lambda i: (i, 0)),          # X_in tile
                pl.BlockSpec((w_rows, LANE), lambda i: (0, 0)),       # weight slab (resident)
                pl.BlockSpec((B_SLAB_ROWS, LANE), lambda i: (0, 0)),  # bias slab (resident)
            ],
            out_specs=pl.BlockSpec((tile_n, a), lambda i: (i, 0)),
        ),
        compiler_params=pltpu.CompilerParams(
            dimension_semantics=("parallel",)),   # shards batch tiles across TCs (v7x)
    )(x_in, w_slab, b_slab)

    return out[:n] if n_pad != n else out


def init_params(key, feat_dim, num_actions):
    """PyTorch-style Linear init: U(-1/sqrt(fan_in), 1/sqrt(fan_in)).
    Weights stored as (in, out) so the kernel does x @ W directly."""
    def linear(k, fan_in, fan_out):
        kw, kb = jax.random.split(k)
        bound = 1.0 / jnp.sqrt(jnp.float32(fan_in))
        w = jax.random.uniform(kw, (fan_in, fan_out), jnp.float32, -bound, bound)
        b = jax.random.uniform(kb, (1, fan_out), jnp.float32, -bound, bound)
        return w, b

    k1, k2, k3 = jax.random.split(key, 3)
    w1, b1 = linear(k1, feat_dim, HIDDEN)
    w2, b2 = linear(k2, HIDDEN, HIDDEN)
    w3, b3 = linear(k3, HIDDEN, num_actions)
    return (w1, b1, w2, b2, w3, b3)


def reference_forward(x, params, action_min, action_max, dot_dtype=jnp.float32):
    """Pure-JAX reference mirroring the kernel's dtype policy for validation."""
    w1, b1, w2, b2, w3, b3 = params

    def lin(h, w, b):
        return jnp.dot(h.astype(dot_dtype), w.astype(dot_dtype),
                       preferred_element_type=jnp.float32) + b.reshape(1, -1)

    h = jnp.maximum(lin(x, w1, b1), 0.0)
    h = jnp.maximum(lin(h, w2, b2), 0.0)
    pi = lin(h, w3, b3)
    amplitude = 0.5 * (action_max - action_min)
    mean = 0.5 * (action_max + action_min)
    return amplitude * jnp.tanh(pi) + mean


if __name__ == "__main__":
    # N vehicles, F features per vehicle, A continuous action dims
    F_DIM, A = 16, 4
    action_min, action_max = -1.0, 1.0

    key = jax.random.PRNGKey(0)
    k_x, k_p, k_x2 = jax.random.split(key, 3)
    params = init_params(k_p, F_DIM, A)

    # --- small-batch path (single grid step), matches the module's typical N ---
    N_SMALL = 8
    # observation = (X_in, adjacency, RL_indice); only X_in drives the actor.
    x_small = jax.random.normal(k_x, (N_SMALL, F_DIM), dtype=jnp.float32)
    act_small = jax.block_until_ready(
        nongraph_actor_forward(x_small, params, action_min, action_max))
    ref_small = reference_forward(x_small, params, action_min, action_max)
    assert act_small.shape == (N_SMALL, A)
    assert jnp.allclose(act_small, ref_small, atol=1e-5, rtol=1e-5), "small-N mismatch"

    # --- batched f32 path (2-step "parallel" grid; weights stay VMEM-resident) ---
    N_BIG = 2048
    x_big = jax.random.normal(k_x2, (N_BIG, F_DIM), dtype=jnp.float32)
    act_big = jax.block_until_ready(
        nongraph_actor_forward(x_big, params, action_min, action_max))
    ref_big = reference_forward(x_big, params, action_min, action_max)
    assert act_big.shape == (N_BIG, A)
    assert jnp.allclose(act_big, ref_big, atol=1e-5, rtol=1e-5), "big-N mismatch"

    # --- bf16 DMA/matmul path (v6e/v7x HBM-traffic optimization) ---
    act_bf16 = jax.block_until_ready(
        nongraph_actor_forward(x_big, params, action_min, action_max,
                               dot_dtype=jnp.bfloat16))
    ref_bf16 = reference_forward(x_big, params, action_min, action_max,
                                 dot_dtype=jnp.bfloat16)
    assert act_bf16.shape == (N_BIG, A)
    assert jnp.allclose(act_bf16, ref_bf16, atol=1e-2, rtol=1e-2), "bf16 mismatch"

    print("KERNEL_OK")
</pallas_src>

<mosaic_0001>
module attributes {stable_mosaic.version = 11 : i64} {
  func.func @_actor_kernel(%arg0: i32, %arg1: memref<8x16xf32, #tpu.memory_space<vmem>>, %arg2: memref<80x128xf32, #tpu.memory_space<vmem>>, %arg3: memref<8x128xf32, #tpu.memory_space<vmem>>, %arg4: memref<8x4xf32, #tpu.memory_space<vmem>>) attributes {dimension_semantics = [#tpu.dimension_semantics<parallel>], iteration_bounds = array<i64: 1>, scalar_prefetch = 0 : i64, scratch_operands = 0 : i64, tpu.core_type = #tpu.core_type<tc>, window_params = [{transform_indices = @transform_0, window_bounds = array<i64: 8, 16>}, {pipeline_mode = #tpu.pipeline_mode<synchronous>, transform_indices = @transform_1, window_bounds = array<i64: 80, 128>}, {pipeline_mode = #tpu.pipeline_mode<synchronous>, transform_indices = @transform_2, window_bounds = array<i64: 8, 128>}, {transform_indices = @transform_3, window_bounds = array<i64: 8, 4>}]} {
    %c0 = arith.constant 0 : index
    %c0_0 = arith.constant 0 : index
    %0 = vector.load %arg1[%c0, %c0_0] : memref<8x16xf32, #tpu.memory_space<vmem>>, vector<8x16xf32>
    %c0_1 = arith.constant 0 : index
    %c0_2 = arith.constant 0 : index
    %1 = vector.load %arg2[%c0_1, %c0_2] : memref<80x128xf32, #tpu.memory_space<vmem>>, vector<16x128xf32>
    %c16 = arith.constant 16 : index
    %c0_3 = arith.constant 0 : index
    %2 = vector.load %arg2[%c16, %c0_3] : memref<80x128xf32, #tpu.memory_space<vmem>>, vector<32x128xf32>
    %c48 = arith.constant 48 : index
    %c0_4 = arith.constant 0 : index
    %3 = vector.load %arg2[%c48, %c0_4] : memref<80x128xf32, #tpu.memory_space<vmem>>, vector<32x128xf32>
    %c0_5 = arith.constant 0 : index
    %c0_6 = arith.constant 0 : index
    %4 = vector.load %arg3[%c0_5, %c0_6] : memref<8x128xf32, #tpu.memory_space<vmem>>, vector<1x128xf32>
    %c1 = arith.constant 1 : index
    %c0_7 = arith.constant 0 : index
    %5 = vector.load %arg3[%c1, %c0_7] : memref<8x128xf32, #tpu.memory_space<vmem>>, vector<1x128xf32>
    %c2 = arith.constant 2 : index
    %c0_8 = arith.constant 0 : index
    %6 = vector.load %arg3[%c2, %c0_8] : memref<8x128xf32, #tpu.memory_space<vmem>>, vector<1x128xf32>
    %cst = arith.constant dense<0.000000e+00> : vector<8x128xf32>
    %7 = tpu.matmul %0, %1, %cst {dimension_numbers = #tpu.dot_dimension_numbers<[1], [0], [0], [1], [0, 0, 1, 1], [], []>} : vector<8x16xf32>, vector<16x128xf32>, vector<8x128xf32> -> vector<8x128xf32>
    %8 = vector.broadcast %4 : vector<1x128xf32> to vector<8x128xf32>
    %9 = arith.addf %7, %8 : vector<8x128xf32>
    %cst_9 = arith.constant 0.000000e+00 : f32
    %10 = vector.broadcast %cst_9 : f32 to vector<8x128xf32>
    %11 = arith.maximumf %9, %10 : vector<8x128xf32>
    %12 = vector.extract_strided_slice %11 {offsets = [0, 0], sizes = [8, 32], strides = [1, 1]} : vector<8x128xf32> to vector<8x32xf32>
    %cst_10 = arith.constant dense<0.000000e+00> : vector<8x128xf32>
    %13 = tpu.matmul %12, %2, %cst_10 {dimension_numbers = #tpu.dot_dimension_numbers<[1], [0], [0], [1], [0, 0, 1, 1], [], []>} : vector<8x32xf32>, vector<32x128xf32>, vector<8x128xf32> -> vector<8x128xf32>
    %14 = vector.broadcast %5 : vector<1x128xf32> to vector<8x128xf32>
    %15 = arith.addf %13, %14 : vector<8x128xf32>
    %cst_11 = arith.constant 0.000000e+00 : f32
    %16 = vector.broadcast %cst_11 : f32 to vector<8x128xf32>
    %17 = arith.maximumf %15, %16 : vector<8x128xf32>
    %18 = vector.extract_strided_slice %17 {offsets = [0, 0], sizes = [8, 32], strides = [1, 1]} : vector<8x128xf32> to vector<8x32xf32>
    %cst_12 = arith.constant dense<0.000000e+00> : vector<8x128xf32>
    %19 = tpu.matmul %18, %3, %cst_12 {dimension_numbers = #tpu.dot_dimension_numbers<[1], [0], [0], [1], [0, 0, 1, 1], [], []>} : vector<8x32xf32>, vector<32x128xf32>, vector<8x128xf32> -> vector<8x128xf32>
    %20 = vector.broadcast %6 : vector<1x128xf32> to vector<8x128xf32>
    %21 = arith.addf %19, %20 : vector<8x128xf32>
    %22 = vector.extract_strided_slice %21 {offsets = [0, 0], sizes = [8, 4], strides = [1, 1]} : vector<8x128xf32> to vector<8x4xf32>
    %23 = math.tanh %22 : vector<8x4xf32>
    %cst_13 = arith.constant 1.000000e+00 : f32
    %24 = vector.broadcast %cst_13 : f32 to vector<8x4xf32>
    %25 = arith.mulf %24, %23 : vector<8x4xf32>
    %cst_14 = arith.constant 0.000000e+00 : f32
    %26 = vector.broadcast %cst_14 : f32 to vector<8x4xf32>
    %27 = arith.addf %25, %26 : vector<8x4xf32>
    %c0_15 = arith.constant 0 : index
    %c0_16 = arith.constant 0 : index
    %28 = vector.load %arg4[%c0_15, %c0_16] : memref<8x4xf32, #tpu.memory_space<vmem>>, vector<8x4xf32>
    tpu.vector_store %arg4[%c0_15, %c0_16], %27 {strides = array<i32>} : memref<8x4xf32, #tpu.memory_space<vmem>>, vector<8x4xf32>,
    return
  }
  func.func @transform_0(%arg0: i32) -> (i32, i32) {
    %c0_i32 = arith.constant 0 : i32
    %c0_i32_0 = arith.constant 0 : i32
    return %arg0, %c0_i32 : i32, i32
  }
  func.func @transform_1(%arg0: i32) -> (i32, i32) {
    %c0_i32 = arith.constant 0 : i32
    %c0_i32_0 = arith.constant 0 : i32
    %c0_i32_1 = arith.constant 0 : i32
    return %c0_i32, %c0_i32_0 : i32, i32
  }
  func.func @transform_2(%arg0: i32) -> (i32, i32) {
    %c0_i32 = arith.constant 0 : i32
    %c0_i32_0 = arith.constant 0 : i32
    %c0_i32_1 = arith.constant 0 : i32
    return %c0_i32, %c0_i32_0 : i32, i32
  }
  func.func @transform_3(%arg0: i32) -> (i32, i32) {
    %c0_i32 = arith.constant 0 : i32
    %c0_i32_0 = arith.constant 0 : i32
    return %arg0, %c0_i32 : i32, i32
  }
}

</mosaic_0001>

<llo_original>
// kernel: tpu_custom_call.1
$region0: #{tpu_custom_call.1}
  #allocation0 [shape = 'u32[]', space=smem, size = 0x4, offset = 0x4, fixed_abs, tag = 'smem constant byte address 0x4 - core index']
  #allocation1 [shape = 'u32[144,128]{1,0:T(1,128)}', space=vmem, size = 0x12000, scoped, tag = 'internal scratch']
  %s0 = inlined_call_operand.hbm [shape: f32[8,16], index: 0, kind: input, shape index: {}]
  %s1 = inlined_call_operand.hbm [shape: f32[80,128], index: 1, kind: input, shape index: {}]
  %s2 = inlined_call_operand.hbm [shape: f32[8,128], index: 2, kind: input, shape index: {}]
  %s3 = inlined_call_operand.vmem [shape: f32[8,4], index: 3, kind: output, shape index: {}]
  %s4 = sld [smem:[#allocation0]]
  $region34: #{tpu_custom_call.1} parent=0
    _
  %s6 = ssub.s32 1, %s4
  %s7 = scalar_select 0, %s6, %s4
  $region1: #{tpu_custom_call.1} parent=0
    #allocation2 [shape = 'u8[4096]{0}', space=vmem, size = 0x1000, scoped, tag = 'input window, operand 0, single buffered']
    #allocation3 [shape = 's32[1]{0}', space=sflag, size = 0x4, scoped, tag = 'scoped memory for tpu_custom_call.1']
    #allocation4 [shape = 'u8[40960]{0}', space=vmem, size = 0xa000, scoped, tag = 'input window, operand 1, single buffered']
    #allocation5 [shape = 's32[1]{0}', space=sflag, size = 0x4, scoped, tag = 'scoped memory for tpu_custom_call.1']
    #allocation6 [shape = 'u8[4096]{0}', space=vmem, size = 0x1000, scoped, tag = 'input window, operand 2, single buffered']
    %8 = vsyncpa [#allocation3], 0
    %9 = vsyncpa [#allocation5], 0
    // Predicated region
    $region2: #{tpu_custom_call.1} parent=1 // pred_check
      _
    $region3: #{tpu_custom_call.1} parent=1 // pred_check_branch
      %11 = sbr.rel (0) target = $region5
    $region4: #{tpu_custom_call.1} parent=1 // pred_region
      %s13 = ssub.s32 128, 128
      %14 = vsyncadd [#allocation3], %s13
      %s16 = sshll.u32 [#allocation2], 4
      %s17 = int_to_ptr.vmem [resolvable:$true] %s16
      %19 = dma.hbm_to_vmem [thread:$0]  %s0, 128, %s17, [#allocation3]
    $region5: #{tpu_custom_call.1} parent=1 // pred_fallthru
      _
    // Predicated region
    $region6: #{tpu_custom_call.1} parent=1 // pred_check
      _
    $region7: #{tpu_custom_call.1} parent=1 // pred_check_branch
      %21 = sbr.rel (0) target = $region9
    $region8: #{tpu_custom_call.1} parent=1 // pred_region
      %s23 = ssub.s32 1280, 1280
      %24 = vsyncadd [#allocation5], %s23
      %s25 = sshll.u32 [#allocation4], 4
      %s26 = int_to_ptr.vmem [resolvable:$true] %s25
      %31 = dma.hbm_to_vmem [thread:$0]  %s1, 1280, %s26, [#allocation5], 128, 128, 8
    $region9: #{tpu_custom_call.1} parent=1 // pred_fallthru
      _
    // Predicated region
    $region10: #{tpu_custom_call.1} parent=1 // pred_check
      _
    $region11: #{tpu_custom_call.1} parent=1 // pred_check_branch
      %33 = sbr.rel (0) target = $region13
    $region12: #{tpu_custom_call.1} parent=1 // pred_region
      %s35 = ssub.s32 128, 128
      %36 = vsyncadd [#allocation5], %s35
      %s38 = sshll.u32 [#allocation6], 4
      %s39 = int_to_ptr.vmem [resolvable:$true] %s38
      %41 = dma.hbm_to_vmem [thread:$0]  %s2, 128, %s39, [#allocation5]
    $region13: #{tpu_custom_call.1} parent=1 // pred_fallthru
      _
    // Predicated region
    $region14: #{tpu_custom_call.1} parent=1 // pred_check
      _
    $region15: #{tpu_custom_call.1} parent=1 // pred_check_branch
      %43 = sbr.rel (0) target = $region17
    $region16: #{tpu_custom_call.1} parent=1 // pred_region
      %44 = dma.done [#allocation3], 128
    $region17: #{tpu_custom_call.1} parent=1 // pred_fallthru
      _
    // Predicated region
    $region18: #{tpu_custom_call.1} parent=1 // pred_check
      _
    $region19: #{tpu_custom_call.1} parent=1 // pred_check_branch
      %46 = sbr.rel (0) target = $region21
    $region20: #{tpu_custom_call.1} parent=1 // pred_region
      %47 = dma.done [#allocation5], 1280
    $region21: #{tpu_custom_call.1} parent=1 // pred_fallthru
      _
    // Predicated region
    $region22: #{tpu_custom_call.1} parent=1 // pred_check
      _
    $region23: #{tpu_custom_call.1} parent=1 // pred_check_branch
      %49 = sbr.rel (0) target = $region25
    $region24: #{tpu_custom_call.1} parent=1 // pred_region
      %50 = dma.done [#allocation5], 128
    $region25: #{tpu_custom_call.1} parent=1 // pred_fallthru
      _
    %v51 = vld [vmem:[#allocation2] sm:$0xff]
    %v52 = vld [vmem:[#allocation4] sm:$0xff]
    %v53 = vld [vmem:[#allocation4 + $0x8] sm:$0xff]
    %v54 = vld [vmem:[#allocation4 + $0x10] sm:$0xff]
    %v55 = vld [vmem:[#allocation4 + $0x18] sm:$0xff]
    %v56 = vld [vmem:[#allocation4 + $0x20] sm:$0xff]
    %v57 = vld [vmem:[#allocation4 + $0x28] sm:$0xff]
    %v58 = vld [vmem:[#allocation4 + $0x30] sm:$0xff]
    %v59 = vld [vmem:[#allocation4 + $0x38] sm:$0xff]
    %v60 = vld [vmem:[#allocation4 + $0x40] sm:$0xff]
    %v61 = vld [vmem:[#allocation4 + $0x48] sm:$0xff]
    %v62 = vld [vmem:[#allocation6] sm:$0x1]
    %v63 = vld [vmem:[#allocation6 + $0x1] sm:$0x1]
    %v64 = vld [vmem:[#allocation6 + $0x2] sm:$0x1]
    %v65 = vlaneseq
    %v66 = vshrl.u32 %v65, 7
    %v67 = vsub.s32 0, %v66
    %v68 = vrot.slane %v62, %v67
    %vm69 = vcmask 130048
    %v71 = vsel %vm69, %v51, 0
    %73 = vmatprep.subr.mxu0 0.0
    %74 = vmatpush1.msra.mxu0 %v52
    %75 = vmatprep.subr.mxu0 0.0
    %76 = vmatpush1.msra.mxu0 %v53
    %77 = vmatprep.subr.mxu0 0.0
    %78 = vmatpush1.msra.mxu0 0.0
    %79 = vmatprep.subr.mxu0 0.0
    %80 = vmatpush1.msra.mxu0 0.0
    %81 = vmatprep.subr.mxu0 0.0
    %82 = vmatpush1.msra.mxu0 0.0
    %83 = vmatprep.subr.mxu0 0.0
    %84 = vmatpush1.msra.mxu0 0.0
    %85 = vmatprep.subr.mxu0 0.0
    %86 = vmatpush1.msra.mxu0 0.0
    %87 = vmatprep.subr.mxu0 0.0
    %88 = vmatpush1.msra.mxu0 0.0
    %89 = vmatprep.subr.mxu0 0.0
    %90 = vmatpush1.msra.mxu0 0.0
    %91 = vmatprep.subr.mxu0 0.0
    %92 = vmatpush1.msra.mxu0 0.0
    %93 = vmatprep.subr.mxu0 0.0
    %94 = vmatpush1.msra.mxu0 0.0
    %95 = vmatprep.subr.mxu0 0.0
    %96 = vmatpush1.msra.mxu0 0.0
    %97 = vmatprep.subr.mxu0 0.0
    %98 = vmatpush1.msra.mxu0 0.0
    %99 = vmatprep.subr.mxu0 0.0
    %100 = vmatpush1.msra.mxu0 0.0
    %101 = vmatprep.subr.mxu0 0.0
    %102 = vmatpush1.msra.mxu0 0.0
    %103 = vmatprep.subr.mxu0 0.0
    %104 = vmatpush1.msra.mxu0 0.0
    %105 = vmatprep.subr.mxu0 0.0
    %106 = vmatpush1.msra.mxu0 0.0
    %107 = vmatprep.subr.mxu0 0.0
    %108 = vmatpush1.msra.mxu0 0.0
    %109 = vmatprep.subr.mxu0 0.0
    %110 = vmatpush1.msra.mxu0 0.0
    %111 = vmatprep.subr.mxu0 0.0
    %112 = vmatpush1.msra.mxu0 0.0
    %113 = vmatprep.subr.mxu0 0.0
    %114 = vmatpush1.msra.mxu0 0.0
    %115 = vmatprep.subr.mxu0 0.0
    %116 = vmatpush1.msra.mxu0 0.0
    %117 = vmatprep.subr.mxu0 0.0
    %118 = vmatpush1.msra.mxu0 0.0
    %119 = vmatprep.subr.mxu0 0.0
    %120 = vmatpush1.msra.mxu0 0.0
    %121 = vmatprep.subr.mxu0 0.0
    %122 = vmatpush1.msra.mxu0 0.0
    %123 = vmatprep.subr.mxu0 0.0
    %124 = vmatpush1.msra.mxu0 0.0
    %125 = vmatprep.subr.mxu0 0.0
    %126 = vmatpush1.msra.mxu0 0.0
    %127 = vmatprep.subr.mxu0 0.0
    %128 = vmatpush1.msra.mxu0 0.0
    %129 = vmatprep.subr.mxu0 0.0
    %130 = vmatpush1.msra.mxu0 0.0
    %131 = vmatprep.subr.mxu0 0.0
    %132 = vmatpush1.msra.mxu0 0.0
    %133 = vmatprep.subr.mxu0 0.0
    %134 = vmatpush1.msra.mxu0 0.0
    %135 = vmatprep.subr.mxu0 0.0
    %136 = vmatpush1.msra.mxu0 0.0
    %137 = vmatprep.mubr.f32.mxu0 0.0
    %138 = vmatmul.mubr.f32.gmra.mrb[0].mxu0 %v71
    %v139 = vpop.f32.mrb[0].mxu0
    %v140 = vadd.f32 %v68, %v139
    %v141 = vpop.f32.mrb[0].mxu0
    %142 = vdwg.mxu0
    %v143 = vmax.f32 %v140, 0.0
    %v144 = vlaneseq
    %v145 = vshrl.u32 %v144, 7
    %v146 = vsub.s32 0, %v145
    %v147 = vrot.slane %v63, %v146
    %vm148 = vcmask 261120
    %v150 = vsel %vm148, %v143, 0
    %152 = vmatprep.subr.mxu0 0.0
    %153 = vmatpush1.msra.mxu0 %v54
    %154 = vmatprep.subr.mxu0 0.0
    %155 = vmatpush1.msra.mxu0 %v55
    %156 = vmatprep.subr.mxu0 0.0
    %157 = vmatpush1.msra.mxu0 %v56
    %158 = vmatprep.subr.mxu0 0.0
    %159 = vmatpush1.msra.mxu0 %v57
    %160 = vmatprep.subr.mxu0 0.0
    %161 = vmatpush1.msra.mxu0 0.0
    %162 = vmatprep.subr.mxu0 0.0
    %163 = vmatpush1.msra.mxu0 0.0
    %164 = vmatprep.subr.mxu0 0.0
    %165 = vmatpush1.msra.mxu0 0.0
    %166 = vmatprep.subr.mxu0 0.0
    %167 = vmatpush1.msra.mxu0 0.0
    %168 = vmatprep.subr.mxu0 0.0
    %169 = vmatpush1.msra.mxu0 0.0
    %170 = vmatprep.subr.mxu0 0.0
    %171 = vmatpush1.msra.mxu0 0.0
    %172 = vmatprep.subr.mxu0 0.0
    %173 = vmatpush1.msra.mxu0 0.0
    %174 = vmatprep.subr.mxu0 0.0
    %175 = vmatpush1.msra.mxu0 0.0
    %176 = vmatprep.subr.mxu0 0.0
    %177 = vmatpush1.msra.mxu0 0.0
    %178 = vmatprep.subr.mxu0 0.0
    %179 = vmatpush1.msra.mxu0 0.0
    %180 = vmatprep.subr.mxu0 0.0
    %181 = vmatpush1.msra.mxu0 0.0
    %182 = vmatprep.subr.mxu0 0.0
    %183 = vmatpush1.msra.mxu0 0.0
    %184 = vmatprep.subr.mxu0 0.0
    %185 = vmatpush1.msra.mxu0 0.0
    %186 = vmatprep.subr.mxu0 0.0
    %187 = vmatpush1.msra.mxu0 0.0
    %188 = vmatprep.subr.mxu0 0.0
    %189 = vmatpush1.msra.mxu0 0.0
    %190 = vmatprep.subr.mxu0 0.0
    %191 = vmatpush1.msra.mxu0 0.0
    %192 = vmatprep.subr.mxu0 0.0
    %193 = vmatpush1.msra.mxu0 0.0
    %194 = vmatprep.subr.mxu0 0.0
    %195 = vmatpush1.msra.mxu0 0.0
    %196 = vmatprep.subr.mxu0 0.0
    %197 = vmatpush1.msra.mxu0 0.0
    %198 = vmatprep.subr.mxu0 0.0
    %199 = vmatpush1.msra.mxu0 0.0
    %200 = vmatprep.subr.mxu0 0.0
    %201 = vmatpush1.msra.mxu0 0.0
    %202 = vmatprep.subr.mxu0 0.0
    %203 = vmatpush1.msra.mxu0 0.0
    %204 = vmatprep.subr.mxu0 0.0
    %205 = vmatpush1.msra.mxu0 0.0
    %206 = vmatprep.subr.mxu0 0.0
    %207 = vmatpush1.msra.mxu0 0.0
    %208 = vmatprep.subr.mxu0 0.0
    %209 = vmatpush1.msra.mxu0 0.0
    %210 = vmatprep.subr.mxu0 0.0
    %211 = vmatpush1.msra.mxu0 0.0
    %212 = vmatprep.subr.mxu0 0.0
    %213 = vmatpush1.msra.mxu0 0.0
    %214 = vmatprep.subr.mxu0 0.0
    %215 = vmatpush1.msra.mxu0 0.0
    %216 = vmatprep.mubr.f32.mxu0 0.0
    %217 = vmatmul.mubr.f32.gmra.mrb[0].mxu0 %v150
    %v218 = vpop.f32.mrb[0].mxu0
    %v219 = vadd.f32 %v147, %v218
    %v220 = vpop.f32.mrb[0].mxu0
    %221 = vdwg.mxu0
    %v222 = vmax.f32 %v219, 0.0
    %v223 = vlaneseq
    %v224 = vshrl.u32 %v223, 7
    %v225 = vsub.s32 0, %v224
    %v226 = vrot.slane %v64, %v225
    %v228 = vsel %vm148, %v222, 0
    %230 = vmatprep.subr.mxu0 0.0
    %231 = vmatpush1.msra.mxu0 %v58
    %232 = vmatprep.subr.mxu0 0.0
    %233 = vmatpush1.msra.mxu0 %v59
    %234 = vmatprep.subr.mxu0 0.0
    %235 = vmatpush1.msra.mxu0 %v60
    %236 = vmatprep.subr.mxu0 0.0
    %237 = vmatpush1.msra.mxu0 %v61
    %238 = vmatprep.subr.mxu0 0.0
    %239 = vmatpush1.msra.mxu0 0.0
    %240 = vmatprep.subr.mxu0 0.0
    %241 = vmatpush1.msra.mxu0 0.0
    %242 = vmatprep.subr.mxu0 0.0
    %243 = vmatpush1.msra.mxu0 0.0
    %244 = vmatprep.subr.mxu0 0.0
    %245 = vmatpush1.msra.mxu0 0.0
    %246 = vmatprep.subr.mxu0 0.0
    %247 = vmatpush1.msra.mxu0 0.0
    %248 = vmatprep.subr.mxu0 0.0
    %249 = vmatpush1.msra.mxu0 0.0
    %250 = vmatprep.subr.mxu0 0.0
    %251 = vmatpush1.msra.mxu0 0.0
    %252 = vmatprep.subr.mxu0 0.0
    %253 = vmatpush1.msra.mxu0 0.0
    %254 = vmatprep.subr.mxu0 0.0
    %255 = vmatpush1.msra.mxu0 0.0
    %256 = vmatprep.subr.mxu0 0.0
    %257 = vmatpush1.msra.mxu0 0.0
    %258 = vmatprep.subr.mxu0 0.0
    %259 = vmatpush1.msra.mxu0 0.0
    %260 = vmatprep.subr.mxu0 0.0
    %261 = vmatpush1.msra.mxu0 0.0
    %262 = vmatprep.subr.mxu0 0.0
    %263 = vmatpush1.msra.mxu0 0.0
    %264 = vmatprep.subr.mxu0 0.0
    %265 = vmatpush1.msra.mxu0 0.0
    %266 = vmatprep.subr.mxu0 0.0
    %267 = vmatpush1.msra.mxu0 0.0
    %268 = vmatprep.subr.mxu0 0.0
    %269 = vmatpush1.msra.mxu0 0.0
    %270 = vmatprep.subr.mxu0 0.0
    %271 = vmatpush1.msra.mxu0 0.0
    %272 = vmatprep.subr.mxu0 0.0
    %273 = vmatpush1.msra.mxu0 0.0
    %274 = vmatprep.subr.mxu0 0.0
    %275 = vmatpush1.msra.mxu0 0.0
    %276 = vmatprep.subr.mxu0 0.0
    %277 = vmatpush1.msra.mxu0 0.0
    %278 = vmatprep.subr.mxu0 0.0
    %279 = vmatpush1.msra.mxu0 0.0
    %280 = vmatprep.subr.mxu0 0.0
    %281 = vmatpush1.msra.mxu0 0.0
    %282 = vmatprep.subr.mxu0 0.0
    %283 = vmatpush1.msra.mxu0 0.0
    %284 = vmatprep.subr.mxu0 0.0
    %285 = vmatpush1.msra.mxu0 0.0
    %286 = vmatprep.subr.mxu0 0.0
    %287 = vmatpush1.msra.mxu0 0.0
    %288 = vmatprep.subr.mxu0 0.0
    %289 = vmatpush1.msra.mxu0 0.0
    %290 = vmatprep.subr.mxu0 0.0
    %291 = vmatpush1.msra.mxu0 0.0
    %292 = vmatprep.subr.mxu0 0.0
    %293 = vmatpush1.msra.mxu0 0.0
    %294 = vmatprep.mubr.f32.mxu0 0.0
    %295 = vmatmul.mubr.f32.gmra.mrb[0].mxu0 %v228
    %v296 = vpop.f32.mrb[0].mxu0
    %v297 = vadd.f32 %v226, %v296
    %v298 = vpop.f32.mrb[0].mxu0
    %299 = vdwg.mxu0
    %v300 = vtanh.pop %v297
    %v301 = vadd.f32 %v300, 0.0
    %vm302 = vcmask 31744
    %303 = vst.msk [vmem:[%s3] sm:$0xff] %vm302, %v301
    // Predicated region
    $region26: #{tpu_custom_call.1} parent=1 // pred_check
      _
    $region27: #{tpu_custom_call.1} parent=1 // pred_check_branch
      %305 = sbr.rel (0) target = $region29
    $region28: #{tpu_custom_call.1} parent=1 // pred_region
      _
    $region29: #{tpu_custom_call.1} parent=1 // pred_fallthru
      _
    // Predicated region
    $region30: #{tpu_custom_call.1} parent=1 // pred_check
      _
    $region31: #{tpu_custom_call.1} parent=1 // pred_check_branch
      %307 = sbr.rel (0) target = $region33
    $region32: #{tpu_custom_call.1} parent=1 // pred_region
      _
    $region33: #{tpu_custom_call.1} parent=1 // pred_fallthru
      _
    %308 = vsyncpa [#allocation3], 1
    %309 = vsyncpa [#allocation5], 1

</llo_original>
